<compile_context>
chip_gen: v5e
topology: v5e:2x2
jax: 0.10.0
libtpu: 0.0.40
codegen_flags: <defaults>
</compile_context>

<pallas_src>
import functools

import numpy as np
import jax
import jax.numpy as jnp
from jax.experimental import pallas as pl
from jax.experimental.pallas import tpu as pltpu


_VMEM_LIMIT_BYTES = 32 * 1024 * 1024   # explicit scoped-VMEM limit (> v5e 16 MiB default,
                                       # comfortably below v7x's 64 MiB physical VMEM)
_VMEM_BUDGET_BYTES = 24 * 1024 * 1024  # batch_block is sized to stay under this


def _round_up(x, m):
    return ((x + m - 1) // m) * m


def _tile_bytes(rows, cols, itemsize=4):
    """f32 VMEM footprint of a [rows, cols] tile after (8, 128) layout padding."""
    return _round_up(max(int(rows), 1), 8) * _round_up(max(int(cols), 1), 128) * itemsize


def _block_vmem_bytes(batch_block, *, seq, din, out_w, weight_shapes, bias_shape):
    """Rough per-grid-step VMEM footprint using 128-lane-padded tile sizes."""
    rows = batch_block * seq
    widest = max(c for _, c in weight_shapes)
    io = 2 * _tile_bytes(rows, din) + 2 * _tile_bytes(batch_block, out_w)   # dbl-buffered I/O
    acts = 3 * _tile_bytes(rows, max(widest, din))                          # ~3 live activations
    wts = sum(2 * _tile_bytes(r, c) for r, c in weight_shapes)              # dbl-buffered weights
    wts += 2 * _tile_bytes(*bias_shape)
    return io + acts + wts


def _choose_batch_block(batch, seq, footprint_fn, budget_bytes):
    """Pick batch_block: a multiple of 8 dividing B (or B itself), within the VMEM
    budget.  Prefer an even parallel grid (>= 2 blocks) so v7x's two TensorCores both
    get work, taking the smallest such block that still gives the MXU >= 256 rows."""
    cands = [bb for bb in range(8, batch, 8) if batch % bb == 0] + [batch]
    fits = [bb for bb in cands if footprint_fn(bb) <= budget_bytes]
    cands = fits if fits else [min(cands)]
    even = [bb for bb in cands if (batch // bb) >= 2 and (batch // bb) % 2 == 0]
    full_m = [bb for bb in even if bb * seq >= 256]
    if full_m:
        return min(full_m)
    if even:
        return max(even)
    return max(cands)


def autoenc_attn_kernel(x_ref,
                        w1_ref, w2_ref, w3_ref,        # encoder weights
                        wa1_ref, wa2t_ref,             # attention weights (wa2 as [1, H/8] row)
                        wd1_ref, wd2_ref, wd3_ref,     # decoder weights (wd3 lane-padded)
                        wc_ref,                        # classifier weight (lane-padded)
                        bias_ref,                      # packed biases [9, max_fout]
                        out_ref,                       # fused output [BB, dec_pad + cls_pad]
                        *, batch_block, seq, widths):
    BB, S = batch_block, seq

    def bias(i):
        # static row + lane-prefix slice of the packed bias slab -> [1, widths[i]]
        return bias_ref[i:i + 1, 0:widths[i]]

    def lin(h, w_ref, i):
        # TODO(synk): at larger hidden_size/Din, cast h and w_ref[...] to bfloat16 here
        # (keeping the f32 accumulate) and relax the 1e-5 test tolerance.
        return jnp.dot(h, w_ref[...], preferred_element_type=jnp.float32) + bias(i)

    x = x_ref[...]                                           # [BB*S, D_in]

    # --- encoder: all BB*S rows in one MXU pass per layer ---
    h = jnp.maximum(lin(x, w1_ref, 0), 0.0)                  # [BB*S, H]
    h = jnp.maximum(lin(h, w2_ref, 1), 0.0)                  # [BB*S, H/2]
    enc = lin(h, w3_ref, 2)                                  # [BB*S, H/4]

    # --- attention logits: N=1 matmul replaced by a VPU reduce over the weight row ---
    a = jnp.tanh(lin(enc, wa1_ref, 3))                       # [BB*S, H/8]
    logits = jnp.sum(a * wa2t_ref[...], axis=-1,
                     keepdims=True) + bias(4)                # [BB*S, 1]

    # --- segment softmax over S kept in column/sublane form: no lane<->sublane
    #     relayouts.  The reshapes below only split the sublane axis; reductions run
    #     over axis=1 (sublanes) and the max/denominator broadcast back down sublanes.
    lg = logits.reshape(BB, S, 1)                            # [BB, S, 1]
    m = jnp.max(lg, axis=1, keepdims=True)                   # [BB, 1, 1]
    p = jnp.exp(lg - m)                                      # [BB, S, 1]
    denom = jnp.sum(p, axis=1, keepdims=True)                # [BB, 1, 1]
    # exact reciprocal keeps the 1e-5 check; approx=True is the free EUP variant.
    attn = p * pl.reciprocal(denom, approx=False)            # [BB, S, 1]

    # --- context: per-segment weighted sum over S (sublane reduction, no transposes) ---
    ctx = jnp.sum(enc.reshape(BB, S, -1) * attn, axis=1)     # [BB, H/4]

    # --- decoder on the whole batch block ---
    d = jnp.maximum(lin(ctx, wd1_ref, 5), 0.0)               # [BB, H/2]
    d = jnp.maximum(lin(d, wd2_ref, 6), 0.0)                 # [BB, H]
    dec = jax.nn.sigmoid(lin(d, wd3_ref, 7))                 # [BB, dec_pad]

    # --- classifier ---
    cls = lin(ctx, wc_ref, 8)                                # [BB, cls_pad]

    # Fused lane-dense output: both halves are full 128-lane tiles (weights were padded
    # in the wrapper), so this is one tile-aligned concat, one unmasked store, and one
    # writeback DMA per grid step.
    out_ref[...] = jnp.concatenate([dec, cls], axis=-1)


def autoencoder_attention_forward(x, params, *, batch_block=None):
    """x: [B, S, D_in] float32. Returns (decoded [B, D_in], classified [B, C])."""
    B, S, Din = x.shape
    (w1, b1, w2, b2, w3, b3,
     wa1, ba1, wa2, ba2,
     wd1, bd1, wd2, bd2, wd3, bd3,
     wc, bc) = params
    C = wc.shape[-1]

    # Lane-dense fused output: dec padded to a multiple of 128 lanes, cls likewise.
    dec_pad = _round_up(Din, 128)
    cls_pad = _round_up(C, 128)
    out_w = dec_pad + cls_pad
    wd3p = jnp.pad(wd3, ((0, 0), (0, dec_pad - Din)))
    bd3p = jnp.pad(bd3, ((0, 0), (0, dec_pad - Din)))
    wcp = jnp.pad(wc, ((0, 0), (0, cls_pad - C)))
    bcp = jnp.pad(bc, ((0, 0), (0, cls_pad - C)))

    # Pack the 9 bias vectors into a single [9, max_fout] slab (one input, one DMA).
    biases = [b1, b2, b3, ba1, ba2, bd1, bd2, bd3p, bcp]
    widths = tuple(int(b.shape[-1]) for b in biases)
    bw = max(widths)
    bias_stack = jnp.stack(
        [jnp.pad(b.reshape(-1), (0, bw - b.shape[-1])) for b in biases])   # [9, bw]

    wa2t = wa2.T                             # [1, H/8] row for the VPU logit reduce
    weights = [w1, w2, w3, wa1, wa2t, wd1, wd2, wd3p, wcp]
    weight_shapes = [tuple(map(int, w.shape)) for w in weights]

    footprint = functools.partial(
        _block_vmem_bytes, seq=S, din=Din, out_w=out_w,
        weight_shapes=weight_shapes, bias_shape=(9, bw))
    if batch_block is None:
        batch_block = _choose_batch_block(B, S, footprint, _VMEM_BUDGET_BYTES)
    assert B % batch_block == 0, "batch_block must divide B"
    assert batch_block == B or batch_block % 8 == 0, (
        "batch_block must be a multiple of 8 (or the whole batch) for (8,128) tiling")
    grid_b = B // batch_block

    x2d = x.reshape(B * S, Din)              # fold batch into the row dim

    kernel = functools.partial(
        autoenc_attn_kernel, batch_block=batch_block, seq=S, widths=widths)

    fused = pl.pallas_call(
        kernel,
        out_shape=jax.ShapeDtypeStruct((B, out_w), jnp.float32),
        grid=(grid_b,),
        in_specs=(
            [pl.BlockSpec((batch_block * S, Din), lambda i: (i, 0))]
            + [pl.BlockSpec(s, lambda i: (0, 0)) for s in weight_shapes]
            + [pl.BlockSpec(bias_stack.shape, lambda i: (0, 0))]
        ),
        out_specs=pl.BlockSpec((batch_block, out_w), lambda i: (i, 0)),
        compiler_params=pltpu.CompilerParams(
            dimension_semantics=("parallel",),
            vmem_limit_bytes=_VMEM_LIMIT_BYTES),
    )(x2d, *weights, bias_stack)

    dec = fused[:, :Din]
    cls = fused[:, dec_pad:dec_pad + C]
    return dec, cls


def init_params(key, input_size, hidden_size, num_classes):
    """Deterministic synthetic init (PyTorch-Linear-like uniform bounds)."""
    dims = [
        (input_size, hidden_size),             # enc1
        (hidden_size, hidden_size // 2),       # enc2
        (hidden_size // 2, hidden_size // 4),  # enc3
        (hidden_size // 4, hidden_size // 8),  # attn1
        (hidden_size // 8, 1),                 # attn2
        (hidden_size // 4, hidden_size // 2),  # dec1
        (hidden_size // 2, hidden_size),       # dec2
        (hidden_size, input_size),             # dec3
        (hidden_size // 4, num_classes),       # classifier
    ]
    keys = jax.random.split(key, 2 * len(dims))
    params = []
    for i, (fin, fout) in enumerate(dims):
        bound = 1.0 / np.sqrt(fin)
        w = jax.random.uniform(keys[2 * i], (fin, fout), jnp.float32, -bound, bound)
        b = jax.random.uniform(keys[2 * i + 1], (1, fout), jnp.float32, -bound, bound)
        params += [w, b]
    return tuple(params)


def reference_forward(x, params):
    (w1, b1, w2, b2, w3, b3,
     wa1, ba1, wa2, ba2,
     wd1, bd1, wd2, bd2, wd3, bd3,
     wc, bc) = params
    h = jax.nn.relu(x @ w1 + b1)
    h = jax.nn.relu(h @ w2 + b2)
    enc = h @ w3 + b3                                    # [B, S, H/4]
    a = jnp.tanh(enc @ wa1 + ba1)
    logits = a @ wa2 + ba2                               # [B, S, 1]
    attn = jax.nn.softmax(logits, axis=1)
    ctx = jnp.sum(enc * attn, axis=1)                    # [B, H/4]
    d = jax.nn.relu(ctx @ wd1 + bd1[0])
    d = jax.nn.relu(d @ wd2 + bd2[0])
    dec = jax.nn.sigmoid(d @ wd3 + bd3[0])
    cls = ctx @ wc + bc[0]
    return dec, cls


if __name__ == "__main__":
    B, S = 2, 8
    input_size, hidden_size, num_classes = 16, 32, 4

    key = jax.random.PRNGKey(0)
    kx, kp = jax.random.split(key)
    x = jax.random.normal(kx, (B, S, input_size), dtype=jnp.float32)
    params = init_params(kp, input_size, hidden_size, num_classes)

    dec, cls = autoencoder_attention_forward(x, params)
    dec, cls = jax.block_until_ready((dec, cls))

    dec_ref, cls_ref = reference_forward(x, params)
    np.testing.assert_allclose(np.asarray(dec), np.asarray(dec_ref),
                               rtol=1e-5, atol=1e-5)
    np.testing.assert_allclose(np.asarray(cls), np.asarray(cls_ref),
                               rtol=1e-5, atol=1e-5)

    print("KERNEL_OK")
</pallas_src>

<mosaic_0001>
module attributes {stable_mosaic.version = 11 : i64} {
  func.func @autoenc_attn_kernel(%arg0: i32, %arg1: memref<16x16xf32, #tpu.memory_space<vmem>>, %arg2: memref<16x32xf32, #tpu.memory_space<vmem>>, %arg3: memref<32x16xf32, #tpu.memory_space<vmem>>, %arg4: memref<16x8xf32, #tpu.memory_space<vmem>>, %arg5: memref<8x4xf32, #tpu.memory_space<vmem>>, %arg6: memref<1x4xf32, #tpu.memory_space<vmem>>, %arg7: memref<8x16xf32, #tpu.memory_space<vmem>>, %arg8: memref<16x32xf32, #tpu.memory_space<vmem>>, %arg9: memref<32x128xf32, #tpu.memory_space<vmem>>, %arg10: memref<8x128xf32, #tpu.memory_space<vmem>>, %arg11: memref<9x128xf32, #tpu.memory_space<vmem>>, %arg12: memref<2x256xf32, #tpu.memory_space<vmem>>) attributes {dimension_semantics = [#tpu.dimension_semantics<parallel>], iteration_bounds = array<i64: 1>, scalar_prefetch = 0 : i64, scratch_operands = 0 : i64, tpu.core_type = #tpu.core_type<tc>, window_params = [{transform_indices = @transform_0, window_bounds = array<i64: 16, 16>}, {pipeline_mode = #tpu.pipeline_mode<synchronous>, transform_indices = @transform_1, window_bounds = array<i64: 16, 32>}, {pipeline_mode = #tpu.pipeline_mode<synchronous>, transform_indices = @transform_2, window_bounds = array<i64: 32, 16>}, {pipeline_mode = #tpu.pipeline_mode<synchronous>, transform_indices = @transform_3, window_bounds = array<i64: 16, 8>}, {pipeline_mode = #tpu.pipeline_mode<synchronous>, transform_indices = @transform_4, window_bounds = array<i64: 8, 4>}, {pipeline_mode = #tpu.pipeline_mode<synchronous>, transform_indices = @transform_5, window_bounds = array<i64: 1, 4>}, {pipeline_mode = #tpu.pipeline_mode<synchronous>, transform_indices = @transform_6, window_bounds = array<i64: 8, 16>}, {pipeline_mode = #tpu.pipeline_mode<synchronous>, transform_indices = @transform_7, window_bounds = array<i64: 16, 32>}, {pipeline_mode = #tpu.pipeline_mode<synchronous>, transform_indices = @transform_8, window_bounds = array<i64: 32, 128>}, {pipeline_mode = #tpu.pipeline_mode<synchronous>, transform_indices = @transform_9, window_bounds = array<i64: 8, 128>}, {pipeline_mode = #tpu.pipeline_mode<synchronous>, transform_indices = @transform_10, window_bounds = array<i64: 9, 128>}, {transform_indices = @transform_11, window_bounds = array<i64: 2, 256>}]} {
    %c0 = arith.constant 0 : index
    %c0_0 = arith.constant 0 : index
    %0 = vector.load %arg1[%c0, %c0_0] : memref<16x16xf32, #tpu.memory_space<vmem>>, vector<16x16xf32>
    %c0_1 = arith.constant 0 : index
    %c0_2 = arith.constant 0 : index
    %1 = vector.load %arg2[%c0_1, %c0_2] : memref<16x32xf32, #tpu.memory_space<vmem>>, vector<16x32xf32>
    %cst = arith.constant dense<0.000000e+00> : vector<16x32xf32>
    %2 = tpu.matmul %0, %1, %cst {dimension_numbers = #tpu.dot_dimension_numbers<[1], [0], [0], [1], [0, 0, 1, 1], [], []>} : vector<16x16xf32>, vector<16x32xf32>, vector<16x32xf32> -> vector<16x32xf32>
    %c0_3 = arith.constant 0 : index
    %c0_4 = arith.constant 0 : index
    %3 = vector.load %arg11[%c0_3, %c0_4] : memref<9x128xf32, #tpu.memory_space<vmem>>, vector<1x32xf32>
    %4 = vector.broadcast %3 : vector<1x32xf32> to vector<16x32xf32>
    %5 = arith.addf %2, %4 : vector<16x32xf32>
    %cst_5 = arith.constant 0.000000e+00 : f32
    %6 = vector.broadcast %cst_5 : f32 to vector<16x32xf32>
    %7 = arith.maximumf %5, %6 : vector<16x32xf32>
    %c0_6 = arith.constant 0 : index
    %c0_7 = arith.constant 0 : index
    %8 = vector.load %arg3[%c0_6, %c0_7] : memref<32x16xf32, #tpu.memory_space<vmem>>, vector<32x16xf32>
    %cst_8 = arith.constant dense<0.000000e+00> : vector<16x16xf32>
    %9 = tpu.matmul %7, %8, %cst_8 {dimension_numbers = #tpu.dot_dimension_numbers<[1], [0], [0], [1], [0, 0, 1, 1], [], []>} : vector<16x32xf32>, vector<32x16xf32>, vector<16x16xf32> -> vector<16x16xf32>
    %c1 = arith.constant 1 : index
    %c0_9 = arith.constant 0 : index
    %10 = vector.load %arg11[%c1, %c0_9] : memref<9x128xf32, #tpu.memory_space<vmem>>, vector<1x16xf32>
    %11 = vector.broadcast %10 : vector<1x16xf32> to vector<16x16xf32>
    %12 = arith.addf %9, %11 : vector<16x16xf32>
    %cst_10 = arith.constant 0.000000e+00 : f32
    %13 = vector.broadcast %cst_10 : f32 to vector<16x16xf32>
    %14 = arith.maximumf %12, %13 : vector<16x16xf32>
    %c0_11 = arith.constant 0 : index
    %c0_12 = arith.constant 0 : index
    %15 = vector.load %arg4[%c0_11, %c0_12] : memref<16x8xf32, #tpu.memory_space<vmem>>, vector<16x8xf32>
    %cst_13 = arith.constant dense<0.000000e+00> : vector<16x8xf32>
    %16 = tpu.matmul %14, %15, %cst_13 {dimension_numbers = #tpu.dot_dimension_numbers<[1], [0], [0], [1], [0, 0, 1, 1], [], []>} : vector<16x16xf32>, vector<16x8xf32>, vector<16x8xf32> -> vector<16x8xf32>
    %c2 = arith.constant 2 : index
    %c0_14 = arith.constant 0 : index
    %17 = vector.load %arg11[%c2, %c0_14] : memref<9x128xf32, #tpu.memory_space<vmem>>, vector<1x8xf32>
    %18 = vector.broadcast %17 : vector<1x8xf32> to vector<16x8xf32>
    %19 = arith.addf %16, %18 : vector<16x8xf32>
    %c0_15 = arith.constant 0 : index
    %c0_16 = arith.constant 0 : index
    %20 = vector.load %arg5[%c0_15, %c0_16] : memref<8x4xf32, #tpu.memory_space<vmem>>, vector<8x4xf32>
    %cst_17 = arith.constant dense<0.000000e+00> : vector<16x4xf32>
    %21 = tpu.matmul %19, %20, %cst_17 {dimension_numbers = #tpu.dot_dimension_numbers<[1], [0], [0], [1], [0, 0, 1, 1], [], []>} : vector<16x8xf32>, vector<8x4xf32>, vector<16x4xf32> -> vector<16x4xf32>
    %c3 = arith.constant 3 : index
    %c0_18 = arith.constant 0 : index
    %22 = vector.load %arg11[%c3, %c0_18] : memref<9x128xf32, #tpu.memory_space<vmem>>, vector<1x4xf32>
    %23 = vector.broadcast %22 : vector<1x4xf32> to vector<16x4xf32>
    %24 = arith.addf %21, %23 : vector<16x4xf32>
    %25 = math.tanh %24 : vector<16x4xf32>
    %c0_19 = arith.constant 0 : index
    %c0_20 = arith.constant 0 : index
    %26 = vector.load %arg6[%c0_19, %c0_20] : memref<1x4xf32, #tpu.memory_space<vmem>>, vector<1x4xf32>
    %27 = vector.broadcast %26 : vector<1x4xf32> to vector<16x4xf32>
    %28 = arith.mulf %25, %27 : vector<16x4xf32>
    %cst_21 = arith.constant dense<0.000000e+00> : vector<16xf32>
    %29 = vector.multi_reduction <add>, %28, %cst_21 [1] : vector<16x4xf32> to vector<16xf32>
    %30 = vector.shape_cast %29 : vector<16xf32> to vector<16x1xf32>
    %c4 = arith.constant 4 : index
    %c0_22 = arith.constant 0 : index
    %31 = vector.load %arg11[%c4, %c0_22] : memref<9x128xf32, #tpu.memory_space<vmem>>, vector<1x1xf32>
    %32 = vector.broadcast %31 : vector<1x1xf32> to vector<16x1xf32>
    %33 = arith.addf %30, %32 : vector<16x1xf32>
    %34 = vector.shape_cast %33 : vector<16x1xf32> to vector<2x8x1xf32>
    %cst_23 = arith.constant dense<0xFF800000> : vector<2x1xf32>
    %35 = vector.multi_reduction <maximumf>, %34, %cst_23 [1] : vector<2x8x1xf32> to vector<2x1xf32>
    %36 = vector.shape_cast %35 : vector<2x1xf32> to vector<2x1x1xf32>
    %37 = vector.broadcast %36 : vector<2x1x1xf32> to vector<2x8x1xf32>
    %38 = arith.subf %34, %37 : vector<2x8x1xf32>
    %39 = math.exp %38 : vector<2x8x1xf32>
    %cst_24 = arith.constant dense<0.000000e+00> : vector<2x1xf32>
    %40 = vector.multi_reduction <add>, %39, %cst_24 [1] : vector<2x8x1xf32> to vector<2x1xf32>
    %41 = vector.shape_cast %40 : vector<2x1xf32> to vector<2x1x1xf32>
    %42 = tpu.reciprocal %41 : vector<2x1x1xf32> -> vector<2x1x1xf32>
    %43 = vector.broadcast %42 : vector<2x1x1xf32> to vector<2x8x1xf32>
    %44 = arith.mulf %39, %43 : vector<2x8x1xf32>
    %45 = vector.shape_cast %19 : vector<16x8xf32> to vector<2x8x8xf32>
    %46 = vector.broadcast %44 : vector<2x8x1xf32> to vector<2x8x8xf32>
    %47 = arith.mulf %45, %46 : vector<2x8x8xf32>
    %cst_25 = arith.constant dense<0.000000e+00> : vector<2x8xf32>
    %48 = vector.multi_reduction <add>, %47, %cst_25 [1] : vector<2x8x8xf32> to vector<2x8xf32>
    %c0_26 = arith.constant 0 : index
    %c0_27 = arith.constant 0 : index
    %49 = vector.load %arg7[%c0_26, %c0_27] : memref<8x16xf32, #tpu.memory_space<vmem>>, vector<8x16xf32>
    %cst_28 = arith.constant dense<0.000000e+00> : vector<2x16xf32>
    %50 = tpu.matmul %48, %49, %cst_28 {dimension_numbers = #tpu.dot_dimension_numbers<[1], [0], [0], [1], [0, 0, 1, 1], [], []>} : vector<2x8xf32>, vector<8x16xf32>, vector<2x16xf32> -> vector<2x16xf32>
    %c5 = arith.constant 5 : index
    %c0_29 = arith.constant 0 : index
    %51 = vector.load %arg11[%c5, %c0_29] : memref<9x128xf32, #tpu.memory_space<vmem>>, vector<1x16xf32>
    %52 = vector.broadcast %51 : vector<1x16xf32> to vector<2x16xf32>
    %53 = arith.addf %50, %52 : vector<2x16xf32>
    %cst_30 = arith.constant 0.000000e+00 : f32
    %54 = vector.broadcast %cst_30 : f32 to vector<2x16xf32>
    %55 = arith.maximumf %53, %54 : vector<2x16xf32>
    %c0_31 = arith.constant 0 : index
    %c0_32 = arith.constant 0 : index
    %56 = vector.load %arg8[%c0_31, %c0_32] : memref<16x32xf32, #tpu.memory_space<vmem>>, vector<16x32xf32>
    %cst_33 = arith.constant dense<0.000000e+00> : vector<2x32xf32>
    %57 = tpu.matmul %55, %56, %cst_33 {dimension_numbers = #tpu.dot_dimension_numbers<[1], [0], [0], [1], [0, 0, 1, 1], [], []>} : vector<2x16xf32>, vector<16x32xf32>, vector<2x32xf32> -> vector<2x32xf32>
    %c6 = arith.constant 6 : index
    %c0_34 = arith.constant 0 : index
    %58 = vector.load %arg11[%c6, %c0_34] : memref<9x128xf32, #tpu.memory_space<vmem>>, vector<1x32xf32>
    %59 = vector.broadcast %58 : vector<1x32xf32> to vector<2x32xf32>
    %60 = arith.addf %57, %59 : vector<2x32xf32>
    %cst_35 = arith.constant 0.000000e+00 : f32
    %61 = vector.broadcast %cst_35 : f32 to vector<2x32xf32>
    %62 = arith.maximumf %60, %61 : vector<2x32xf32>
    %c0_36 = arith.constant 0 : index
    %c0_37 = arith.constant 0 : index
    %63 = vector.load %arg9[%c0_36, %c0_37] : memref<32x128xf32, #tpu.memory_space<vmem>>, vector<32x128xf32>
    %cst_38 = arith.constant dense<0.000000e+00> : vector<2x128xf32>
    %64 = tpu.matmul %62, %63, %cst_38 {dimension_numbers = #tpu.dot_dimension_numbers<[1], [0], [0], [1], [0, 0, 1, 1], [], []>} : vector<2x32xf32>, vector<32x128xf32>, vector<2x128xf32> -> vector<2x128xf32>
    %c7 = arith.constant 7 : index
    %c0_39 = arith.constant 0 : index
    %65 = vector.load %arg11[%c7, %c0_39] : memref<9x128xf32, #tpu.memory_space<vmem>>, vector<1x128xf32>
    %66 = vector.broadcast %65 : vector<1x128xf32> to vector<2x128xf32>
    %67 = arith.addf %64, %66 : vector<2x128xf32>
    %68 = arith.negf %67 : vector<2x128xf32>
    %69 = math.exp %68 : vector<2x128xf32>
    %cst_40 = arith.constant 1.000000e+00 : f32
    %70 = vector.broadcast %cst_40 : f32 to vector<2x128xf32>
    %71 = arith.addf %70, %69 : vector<2x128xf32>
    %72 = arith.divf %70, %71 : vector<2x128xf32>
    %c0_41 = arith.constant 0 : index
    %c0_42 = arith.constant 0 : index
    %73 = vector.load %arg10[%c0_41, %c0_42] : memref<8x128xf32, #tpu.memory_space<vmem>>, vector<8x128xf32>
    %cst_43 = arith.constant dense<0.000000e+00> : vector<2x128xf32>
    %74 = tpu.matmul %48, %73, %cst_43 {dimension_numbers = #tpu.dot_dimension_numbers<[1], [0], [0], [1], [0, 0, 1, 1], [], []>} : vector<2x8xf32>, vector<8x128xf32>, vector<2x128xf32> -> vector<2x128xf32>
    %c8 = arith.constant 8 : index
    %c0_44 = arith.constant 0 : index
    %75 = vector.load %arg11[%c8, %c0_44] : memref<9x128xf32, #tpu.memory_space<vmem>>, vector<1x128xf32>
    %76 = vector.broadcast %75 : vector<1x128xf32> to vector<2x128xf32>
    %77 = arith.addf %74, %76 : vector<2x128xf32>
    %78 = tpu.concatenate %72, %77 in 1 : vector<2x128xf32>, vector<2x128xf32> -> vector<2x256xf32>
    %c0_45 = arith.constant 0 : index
    %c0_46 = arith.constant 0 : index
    %79 = vector.load %arg12[%c0_45, %c0_46] : memref<2x256xf32, #tpu.memory_space<vmem>>, vector<2x256xf32>
    tpu.vector_store %arg12[%c0_45, %c0_46], %78 {strides = array<i32>} : memref<2x256xf32, #tpu.memory_space<vmem>>, vector<2x256xf32>,
    return
  }
  func.func @transform_0(%arg0: i32) -> (i32, i32) {
    %c0_i32 = arith.constant 0 : i32
    %c0_i32_0 = arith.constant 0 : i32
    return %arg0, %c0_i32 : i32, i32
  }
  func.func @transform_1(%arg0: i32) -> (i32, i32) {
    %c0_i32 = arith.constant 0 : i32
    %c0_i32_0 = arith.constant 0 : i32
    %c0_i32_1 = arith.constant 0 : i32
    return %c0_i32, %c0_i32_0 : i32, i32
  }
  func.func @transform_2(%arg0: i32) -> (i32, i32) {
    %c0_i32 = arith.constant 0 : i32
    %c0_i32_0 = arith.constant 0 : i32
    %c0_i32_1 = arith.constant 0 : i32
    return %c0_i32, %c0_i32_0 : i32, i32
  }
  func.func @transform_3(%arg0: i32) -> (i32, i32) {
    %c0_i32 = arith.constant 0 : i32
    %c0_i32_0 = arith.constant 0 : i32
    %c0_i32_1 = arith.constant 0 : i32
    return %c0_i32, %c0_i32_0 : i32, i32
  }
  func.func @transform_4(%arg0: i32) -> (i32, i32) {
    %c0_i32 = arith.constant 0 : i32
    %c0_i32_0 = arith.constant 0 : i32
    %c0_i32_1 = arith.constant 0 : i32
    return %c0_i32, %c0_i32_0 : i32, i32
  }
  func.func @transform_5(%arg0: i32) -> (i32, i32) {
    %c0_i32 = arith.constant 0 : i32
    %c0_i32_0 = arith.constant 0 : i32
    %c0_i32_1 = arith.constant 0 : i32
    return %c0_i32, %c0_i32_0 : i32, i32
  }
  func.func @transform_6(%arg0: i32) -> (i32, i32) {
    %c0_i32 = arith.constant 0 : i32
    %c0_i32_0 = arith.constant 0 : i32
    %c0_i32_1 = arith.constant 0 : i32
    return %c0_i32, %c0_i32_0 : i32, i32
  }
  func.func @transform_7(%arg0: i32) -> (i32, i32) {
    %c0_i32 = arith.constant 0 : i32
    %c0_i32_0 = arith.constant 0 : i32
    %c0_i32_1 = arith.constant 0 : i32
    return %c0_i32, %c0_i32_0 : i32, i32
  }
  func.func @transform_8(%arg0: i32) -> (i32, i32) {
    %c0_i32 = arith.constant 0 : i32
    %c0_i32_0 = arith.constant 0 : i32
    %c0_i32_1 = arith.constant 0 : i32
    return %c0_i32, %c0_i32_0 : i32, i32
  }
  func.func @transform_9(%arg0: i32) -> (i32, i32) {
    %c0_i32 = arith.constant 0 : i32
    %c0_i32_0 = arith.constant 0 : i32
    %c0_i32_1 = arith.constant 0 : i32
    return %c0_i32, %c0_i32_0 : i32, i32
  }
  func.func @transform_10(%arg0: i32) -> (i32, i32) {
    %c0_i32 = arith.constant 0 : i32
    %c0_i32_0 = arith.constant 0 : i32
    %c0_i32_1 = arith.constant 0 : i32
    return %c0_i32, %c0_i32_0 : i32, i32
  }
  func.func @transform_11(%arg0: i32) -> (i32, i32) {
    %c0_i32 = arith.constant 0 : i32
    %c0_i32_0 = arith.constant 0 : i32
    return %arg0, %c0_i32 : i32, i32
  }
}

</mosaic_0001>

<llo_original>
// kernel: tpu_custom_call.1
$region0: #{tpu_custom_call.1}
  #allocation0 [shape = 'u32[]', space=smem, size = 0x4, offset = 0x4, fixed_abs, tag = 'smem constant byte address 0x4 - core index']
  #allocation1 [shape = 'u32[72,128]{1,0:T(1,128)}', space=vmem, size = 0x9000, scoped, tag = 'internal scratch']
  %s0 = inlined_call_operand.vmem [shape: f32[16,16], index: 0, kind: input, shape index: {}]
  %s1 = inlined_call_operand.hbm [shape: f32[16,32], index: 1, kind: input, shape index: {}]
  %s2 = inlined_call_operand.vmem [shape: f32[32,16], index: 2, kind: input, shape index: {}]
  %s3 = inlined_call_operand.vmem [shape: f32[16,8], index: 3, kind: input, shape index: {}]
  %s4 = inlined_call_operand.vmem [shape: f32[8,4], index: 4, kind: input, shape index: {}]
  %s5 = inlined_call_operand.hbm [shape: f32[1,4], index: 5, kind: input, shape index: {}]
  %s6 = inlined_call_operand.vmem [shape: f32[8,16], index: 6, kind: input, shape index: {}]
  %s7 = inlined_call_operand.hbm [shape: f32[16,32], index: 7, kind: input, shape index: {}]
  %s8 = inlined_call_operand.vmem [shape: f32[32,128], index: 8, kind: input, shape index: {}]
  %s9 = inlined_call_operand.vmem [shape: f32[8,128], index: 9, kind: input, shape index: {}]
  %s10 = inlined_call_operand.hbm [shape: f32[9,128], index: 10, kind: input, shape index: {}]
  %s11 = inlined_call_operand.hbm [shape: f32[2,256], index: 11, kind: output, shape index: {}]
  %s12 = sld [smem:[#allocation0]]
  $region70: #{tpu_custom_call.1} parent=0
    _
  %s14 = ssub.s32 1, %s12
  %s15 = scalar_select 0, %s14, %s12
  $region1: #{tpu_custom_call.1} parent=0
    #allocation2 [shape = 'u8[8192]{0}', space=vmem, size = 0x2000, scoped, tag = 'input window, operand 1, single buffered']
    #allocation3 [shape = 's32[1]{0}', space=sflag, size = 0x4, scoped, tag = 'scoped memory for tpu_custom_call.1']
    #allocation4 [shape = 's32[1]{0}', space=sflag, size = 0x4, scoped, tag = 'scoped memory for tpu_custom_call.1']
    #allocation5 [shape = 'u8[512]{0}', space=vmem, size = 0x400, scoped, tag = 'input window, operand 5, single buffered']
    #allocation6 [shape = 's32[1]{0}', space=sflag, size = 0x4, scoped, tag = 'scoped memory for tpu_custom_call.1']
    #allocation7 [shape = 'u8[8192]{0}', space=vmem, size = 0x2000, scoped, tag = 'input window, operand 7, single buffered']
    #allocation8 [shape = 'u8[8192]{0}', space=vmem, size = 0x2000, scoped, tag = 'input window, operand 10, single buffered']
    #allocation9 [shape = 's32[1]{0}', space=sflag, size = 0x4, scoped, tag = 'scoped memory for tpu_custom_call.1']
    #allocation10 [shape = 'u8[2048]{0}', space=vmem, size = 0x800, scoped, tag = 'output window, operand 0, single buffered']
    %16 = vsyncpa [#allocation3], 0
    %17 = vsyncpa [#allocation6], 0
    %18 = vsyncpa [#allocation9], 0
    %19 = vsyncpa [#allocation4], 0
    // Predicated region
    $region2: #{tpu_custom_call.1} parent=1 // pred_check
      _
    $region3: #{tpu_custom_call.1} parent=1 // pred_check_branch
      %21 = sbr.rel (0) target = $region5
    $region4: #{tpu_custom_call.1} parent=1 // pred_region
      _
    $region5: #{tpu_custom_call.1} parent=1 // pred_fallthru
      _
    // Predicated region
    $region6: #{tpu_custom_call.1} parent=1 // pred_check
      _
    $region7: #{tpu_custom_call.1} parent=1 // pred_check_branch
      %23 = sbr.rel (0) target = $region9
    $region8: #{tpu_custom_call.1} parent=1 // pred_region
      %25 = vsyncadd [#allocation3], 0
      %s26 = sshll.u32 %s1, 4
      %s27 = int_to_ptr.hbm [resolvable:$true] %s26
      %s28 = sshll.u32 [#allocation2], 4
      %s29 = int_to_ptr.vmem [resolvable:$true] %s28
      %34 = dma.hbm_to_vmem [thread:$0]  %s27, 256, %s29, [#allocation3], 128, 128, 8
    $region9: #{tpu_custom_call.1} parent=1 // pred_fallthru
      _
    // Predicated region
    $region10: #{tpu_custom_call.1} parent=1 // pred_check
      _
    $region11: #{tpu_custom_call.1} parent=1 // pred_check_branch
      %36 = sbr.rel (0) target = $region13
    $region12: #{tpu_custom_call.1} parent=1 // pred_region
      _
    $region13: #{tpu_custom_call.1} parent=1 // pred_fallthru
      _
    // Predicated region
    $region14: #{tpu_custom_call.1} parent=1 // pred_check
      _
    $region15: #{tpu_custom_call.1} parent=1 // pred_check_branch
      %38 = sbr.rel (0) target = $region17
    $region16: #{tpu_custom_call.1} parent=1 // pred_region
      _
    $region17: #{tpu_custom_call.1} parent=1 // pred_fallthru
      _
    // Predicated region
    $region18: #{tpu_custom_call.1} parent=1 // pred_check
      _
    $region19: #{tpu_custom_call.1} parent=1 // pred_check_branch
      %40 = sbr.rel (0) target = $region21
    $region20: #{tpu_custom_call.1} parent=1 // pred_region
      _
    $region21: #{tpu_custom_call.1} parent=1 // pred_fallthru
      _
    // Predicated region
    $region22: #{tpu_custom_call.1} parent=1 // pred_check
      _
    $region23: #{tpu_custom_call.1} parent=1 // pred_check_branch
      %42 = sbr.rel (0) target = $region25
    $region24: #{tpu_custom_call.1} parent=1 // pred_region
      %44 = vsyncadd [#allocation6], 0
      %s46 = sshll.u32 %s5, 4
      %s47 = int_to_ptr.hbm [resolvable:$true] %s46
      %s48 = sshll.u32 [#allocation5], 4
      %s49 = int_to_ptr.vmem [resolvable:$true] %s48
      %51 = dma.hbm_to_vmem [thread:$0]  %s47, 16, %s49, [#allocation6]
    $region25: #{tpu_custom_call.1} parent=1 // pred_fallthru
      _
    // Predicated region
    $region26: #{tpu_custom_call.1} parent=1 // pred_check
      _
    $region27: #{tpu_custom_call.1} parent=1 // pred_check_branch
      %53 = sbr.rel (0) target = $region29
    $region28: #{tpu_custom_call.1} parent=1 // pred_region
      _
    $region29: #{tpu_custom_call.1} parent=1 // pred_fallthru
      _
    // Predicated region
    $region30: #{tpu_custom_call.1} parent=1 // pred_check
      _
    $region31: #{tpu_custom_call.1} parent=1 // pred_check_branch
      %55 = sbr.rel (0) target = $region33
    $region32: #{tpu_custom_call.1} parent=1 // pred_region
      %57 = vsyncadd [#allocation6], 0
      %s58 = sshll.u32 %s7, 4
      %s59 = int_to_ptr.hbm [resolvable:$true] %s58
      %s60 = sshll.u32 [#allocation7], 4
      %s61 = int_to_ptr.vmem [resolvable:$true] %s60
      %66 = dma.hbm_to_vmem [thread:$0]  %s59, 256, %s61, [#allocation6], 128, 128, 8
    $region33: #{tpu_custom_call.1} parent=1 // pred_fallthru
      _
    // Predicated region
    $region34: #{tpu_custom_call.1} parent=1 // pred_check
      _
    $region35: #{tpu_custom_call.1} parent=1 // pred_check_branch
      %68 = sbr.rel (0) target = $region37
    $region36: #{tpu_custom_call.1} parent=1 // pred_region
      _
    $region37: #{tpu_custom_call.1} parent=1 // pred_fallthru
      _
    // Predicated region
    $region38: #{tpu_custom_call.1} parent=1 // pred_check
      _
    $region39: #{tpu_custom_call.1} parent=1 // pred_check_branch
      %70 = sbr.rel (0) target = $region41
    $region40: #{tpu_custom_call.1} parent=1 // pred_region
      _
    $region41: #{tpu_custom_call.1} parent=1 // pred_fallthru
      _
    // Predicated region
    $region42: #{tpu_custom_call.1} parent=1 // pred_check
      _
    $region43: #{tpu_custom_call.1} parent=1 // pred_check_branch
      %72 = sbr.rel (0) target = $region45
    $region44: #{tpu_custom_call.1} parent=1 // pred_region
      %74 = vsyncadd [#allocation9], 0
      %s75 = sshll.u32 %s10, 4
      %s76 = int_to_ptr.hbm [resolvable:$true] %s75
      %s77 = sshll.u32 [#allocation8], 4
      %s78 = int_to_ptr.vmem [resolvable:$true] %s77
      %83 = dma.hbm_to_vmem [thread:$0]  %s76, 256, %s78, [#allocation9], 128, 128, 8
    $region45: #{tpu_custom_call.1} parent=1 // pred_fallthru
      _
    // Predicated region
    $region46: #{tpu_custom_call.1} parent=1 // pred_check
      _
    $region47: #{tpu_custom_call.1} parent=1 // pred_check_branch
      %85 = sbr.rel (0) target = $region49
    $region48: #{tpu_custom_call.1} parent=1 // pred_region
      %87 = dma.done [#allocation3], 256
    $region49: #{tpu_custom_call.1} parent=1 // pred_fallthru
      _
    // Predicated region
    $region50: #{tpu_custom_call.1} parent=1 // pred_check
      _
    $region51: #{tpu_custom_call.1} parent=1 // pred_check_branch
      %89 = sbr.rel (0) target = $region53
    $region52: #{tpu_custom_call.1} parent=1 // pred_region
      %91 = dma.done [#allocation6], 16
    $region53: #{tpu_custom_call.1} parent=1 // pred_fallthru
      _
    // Predicated region
    $region54: #{tpu_custom_call.1} parent=1 // pred_check
      _
    $region55: #{tpu_custom_call.1} parent=1 // pred_check_branch
      %93 = sbr.rel (0) target = $region57
    $region56: #{tpu_custom_call.1} parent=1 // pred_region
      %95 = dma.done [#allocation6], 256
    $region57: #{tpu_custom_call.1} parent=1 // pred_fallthru
      _
    // Predicated region
    $region58: #{tpu_custom_call.1} parent=1 // pred_check
      _
    $region59: #{tpu_custom_call.1} parent=1 // pred_check_branch
      %97 = sbr.rel (0) target = $region61
    $region60: #{tpu_custom_call.1} parent=1 // pred_region
      %99 = dma.done [#allocation9], 256
    $region61: #{tpu_custom_call.1} parent=1 // pred_fallthru
      _
    %v100 = vld [vmem:[%s0] sm:$0xff]
    %v101 = vld [vmem:[%s0 + $0x8] sm:$0xff]
    %v102 = vld [vmem:[#allocation2] sm:$0xff]
    %v103 = vld [vmem:[#allocation2 + $0x8] sm:$0xff]
    %v104 = vld [vmem:[#allocation8] sm:$0x1]
    %v105 = vperm.slane %v104, 0
    %vm106 = vcmask 130048
    %v108 = vsel %vm106, %v100, 0
    %v111 = vsel %vm106, %v101, 0
    %113 = vmatpush.msra.mxu0 0.0
    %114 = vmatpush.msra.mxu0 0.0
    %115 = vmatpush.msra.mxu0 0.0
    %116 = vmatpush.msra.mxu0 0.0
    %117 = vmatpush.msra.mxu0 0.0
    %118 = vmatpush.msra.mxu0 0.0
    %119 = vmatpush.msra.mxu0 0.0
    %120 = vmatpush.msra.mxu0 0.0
    %121 = vmatpush.msra.mxu0 0.0
    %122 = vmatpush.msra.mxu0 0.0
    %123 = vmatpush.msra.mxu0 0.0
    %124 = vmatpush.msra.mxu0 0.0
    %125 = vmatpush.msra.mxu0 0.0
    %126 = vmatpush.msra.mxu0 0.0
    %127 = vmatpush.msra.mxu0 %v103
    %128 = vmatpush.msra.mxu0 %v102
    %129 = vmatmul.f32.gmra.mxu0 %v108
    %v130 = vpop.f32.mrf.mxu0
    %v131 = vadd.f32 %v105, %v130
    %132 = vmatmul.f32.gmra.mxu0 %v111
    %v133 = vpop.f32.mrf.mxu0
    %v134 = vadd.f32 %v105, %v133
    %135 = vdwg.mxu0
    %v136 = vmax.f32 %v131, 0.0
    %v137 = vmax.f32 %v134, 0.0
    %v138 = vld [vmem:[%s2] sm:$0xff]
    %v139 = vld [vmem:[%s2 + $0x8] sm:$0xff]
    %v140 = vld [vmem:[%s2 + $0x10] sm:$0xff]
    %v141 = vld [vmem:[%s2 + $0x18] sm:$0xff]
    %v142 = vld [vmem:[#allocation8 + $0x1] sm:$0x1]
    %v143 = vperm.slane %v142, 0
    %vm144 = vcmask 261120
    %v146 = vsel %vm144, %v136, 0
    %v149 = vsel %vm144, %v137, 0
    %151 = vmatpush.msra.mxu0 0.0
    %152 = vmatpush.msra.mxu0 0.0
    %153 = vmatpush.msra.mxu0 0.0
    %154 = vmatpush.msra.mxu0 0.0
    %155 = vmatpush.msra.mxu0 0.0
    %156 = vmatpush.msra.mxu0 0.0
    %157 = vmatpush.msra.mxu0 0.0
    %158 = vmatpush.msra.mxu0 0.0
    %159 = vmatpush.msra.mxu0 0.0
    %160 = vmatpush.msra.mxu0 0.0
    %161 = vmatpush.msra.mxu0 0.0
    %162 = vmatpush.msra.mxu0 0.0
    %163 = vmatpush.msra.mxu0 %v141
    %164 = vmatpush.msra.mxu0 %v140
    %165 = vmatpush.msra.mxu0 %v139
    %166 = vmatpush.msra.mxu0 %v138
    %167 = vmatmul.f32.gmra.mxu0 %v146
    %v168 = vpop.f32.mrf.mxu0
    %v169 = vadd.f32 %v143, %v168
    %170 = vmatmul.f32.gmra.mxu0 %v149
    %v171 = vpop.f32.mrf.mxu0
    %v172 = vadd.f32 %v143, %v171
    %173 = vdwg.mxu0
    %v174 = vmax.f32 %v169, 0.0
    %v175 = vmax.f32 %v172, 0.0
    %v176 = vld [vmem:[%s3] sm:$0xff]
    %v177 = vld [vmem:[%s3 + $0x8] sm:$0xff]
    %v178 = vld [vmem:[#allocation8 + $0x2] sm:$0x1]
    %v179 = vperm.slane %v178, 0
    %v181 = vsel %vm106, %v174, 0
    %v184 = vsel %vm106, %v175, 0
    %186 = vmatpush.msra.mxu0 0.0
    %187 = vmatpush.msra.mxu0 0.0
    %188 = vmatpush.msra.mxu0 0.0
    %189 = vmatpush.msra.mxu0 0.0
    %190 = vmatpush.msra.mxu0 0.0
    %191 = vmatpush.msra.mxu0 0.0
    %192 = vmatpush.msra.mxu0 0.0
    %193 = vmatpush.msra.mxu0 0.0
    %194 = vmatpush.msra.mxu0 0.0
    %195 = vmatpush.msra.mxu0 0.0
    %196 = vmatpush.msra.mxu0 0.0
    %197 = vmatpush.msra.mxu0 0.0
    %198 = vmatpush.msra.mxu0 0.0
    %199 = vmatpush.msra.mxu0 0.0
    %200 = vmatpush.msra.mxu0 %v177
    %201 = vmatpush.msra.mxu0 %v176
    %202 = vmatmul.f32.gmra.mxu0 %v181
    %v203 = vpop.f32.mrf.mxu0
    %v204 = vadd.f32 %v179, %v203
    %205 = vmatmul.f32.gmra.mxu0 %v184
    %v206 = vpop.f32.mrf.mxu0
    %v207 = vadd.f32 %v179, %v206
    %208 = vdwg.mxu0
    %v209 = vld [vmem:[%s4] sm:$0xff]
    %v210 = vld [vmem:[#allocation8 + $0x3] sm:$0x1]
    %v211 = vperm.slane %v210, 0
    %vm212 = vcmask 64512
    %v214 = vsel %vm212, %v204, 0
    %v217 = vsel %vm212, %v207, 0
    %219 = vmatpush.msra.mxu0 0.0
    %220 = vmatpush.msra.mxu0 0.0
    %221 = vmatpush.msra.mxu0 0.0
    %222 = vmatpush.msra.mxu0 0.0
    %223 = vmatpush.msra.mxu0 0.0
    %224 = vmatpush.msra.mxu0 0.0
    %225 = vmatpush.msra.mxu0 0.0
    %226 = vmatpush.msra.mxu0 0.0
    %227 = vmatpush.msra.mxu0 0.0
    %228 = vmatpush.msra.mxu0 0.0
    %229 = vmatpush.msra.mxu0 0.0
    %230 = vmatpush.msra.mxu0 0.0
    %231 = vmatpush.msra.mxu0 0.0
    %232 = vmatpush.msra.mxu0 0.0
    %233 = vmatpush.msra.mxu0 0.0
    %234 = vmatpush.msra.mxu0 %v209
    %235 = vmatmul.f32.gmra.mxu0 %v214
    %v236 = vpop.f32.mrf.mxu0
    %v237 = vadd.f32 %v211, %v236
    %238 = vmatmul.f32.gmra.mxu0 %v217
    %v239 = vpop.f32.mrf.mxu0
    %v240 = vadd.f32 %v211, %v239
    %241 = vdwg.mxu0
    %v242 = vtanh.pop %v237
    %v243 = vtanh.pop %v240
    %v244 = vld [vmem:[#allocation5] sm:$0x1]
    %v246 = vperm.slane %v244, 0
    %v248 = vmul.f32 %v242, %v246
    %v249 = vmul.f32 %v243, %v246
    %vm250 = vcmask 31744
    %v251 = vsel %vm250, %v248, 0.0
    %252 = vadd.xlane.f32.xlu0 %v251
    %v253 = vpop.xlane.xlu0 %252
    %v254 = vsel %vm250, %v249, 0.0
    %255 = vadd.xlane.f32.xlu0 %v254
    %v256 = vpop.xlane.xlu0 %255
    %v257 = vld [vmem:[#allocation8 + $0x4] sm:$0x1]
    %v258 = vperm.slane %v257, 0
    %v259 = vadd.f32 %v253, %v258
    %v260 = vadd.f32 %v256, %v258
    %vm261 = vcmask 7168
    %v262 = vsel %vm261, %v259, -inf
    %v263 = vrot.slane %v262, 4
    %v264 = vmax.f32 %v262, %v263
    %v265 = vrot.slane %v264, 2
    %v266 = vmax.f32 %v264, %v265
    %v267 = vrot.slane %v266, 1
    %v268 = vmax.f32 %v266, %v267
    %v269 = vsel %vm261, %v260, -inf
    %v270 = vrot.slane %v269, 4
    %v271 = vmax.f32 %v269, %v270
    %v272 = vrot.slane %v271, 2
    %v273 = vmax.f32 %v271, %v272
    %v274 = vrot.slane %v273, 1
    %v275 = vmax.f32 %v273, %v274
    %v276 = vsub.f32 %v259, %v268
    %v277 = vsub.f32 %v260, %v275
    %v278 = vmul.f32 %v276, 1.442695
    %v279 = vpow.pop %v278
    %v280 = vmul.f32 %v277, 1.442695
    %v281 = vpow.pop %v280
    %v282 = vsel %vm261, %v279, 0.0
    %v283 = vrot.slane %v282, 4
    %v284 = vadd.f32 %v282, %v283
    %v285 = vrot.slane %v284, 2
    %v286 = vadd.f32 %v284, %v285
    %v287 = vrot.slane %v286, 1
    %v288 = vadd.f32 %v286, %v287
    %v289 = vsel %vm261, %v281, 0.0
    %v290 = vrot.slane %v289, 4
    %v291 = vadd.f32 %v289, %v290
    %v292 = vrot.slane %v291, 2
    %v293 = vadd.f32 %v291, %v292
    %v294 = vrot.slane %v293, 1
    %v295 = vadd.f32 %v293, %v294
    %v296 = vrcp.pop %v288
    %v297 = vmul.f32 %v288, %v296
    %v298 = vsub.f32 1.0, %v297
    %v299 = vmul.f32 %v296, %v298
    %v300 = vadd.f32 %v296, %v299
    %vm301 = vweird.f32 %v288
    %vm302 = vweird.f32 %v296
    %vm303 = vmor %vm301, %vm302
    %v304 = vsel %vm303, %v296, %v300
    %v305 = vand.u32 2147483647, %v288
    %vm306 = vcmp.eq.f32.partialorder %v305, 8.507059e+37
    %v307 = vand.u32 %v288, 2147483648
    %v308 = vor.u32 1.1754944e-38, %v307
    %v309 = vsel %vm306, %v308, %v304
    %v310 = vrcp.pop %v295
    %v311 = vmul.f32 %v295, %v310
    %v312 = vsub.f32 1.0, %v311
    %v313 = vmul.f32 %v310, %v312
    %v314 = vadd.f32 %v310, %v313
    %vm315 = vweird.f32 %v295
    %vm316 = vweird.f32 %v310
    %vm317 = vmor %vm315, %vm316
    %v318 = vsel %vm317, %v310, %v314
    %v319 = vand.u32 2147483647, %v295
    %vm320 = vcmp.eq.f32.partialorder %v319, 8.507059e+37
    %v321 = vand.u32 %v295, 2147483648
    %v322 = vor.u32 1.1754944e-38, %v321
    %v323 = vsel %vm320, %v322, %v318
    %v324 = vmul.f32 %v279, %v309
    %v325 = vmul.f32 %v281, %v323
    %327 = vset.pattern.permute.xlu0 0
    %328 = vperm.xlu0 %327, %v324
    %v329 = vpop.permute.xlu0 %328
    %332 = vset.pattern.permute.xlu0 0
    %333 = vperm.xlu0 %332, %v325
    %v334 = vpop.permute.xlu0 %333
    %v336 = vmul.f32 %v204, %v329
    %v337 = vmul.f32 %v207, %v334
    %v338 = vsel %vm212, %v336, 0.0
    %v339 = vrot.slane %v338, 4
    %v340 = vadd.f32 %v338, %v339
    %v341 = vrot.slane %v340, 2
    %v342 = vadd.f32 %v340, %v341
    %v343 = vrot.slane %v342, 1
    %v344 = vadd.f32 %v342, %v343
    %v345 = vsel %vm212, %v337, 0.0
    %v346 = vrot.slane %v345, 4
    %v347 = vadd.f32 %v345, %v346
    %v348 = vrot.slane %v347, 2
    %v349 = vadd.f32 %v347, %v348
    %v350 = vrot.slane %v349, 1
    %v351 = vadd.f32 %v349, %v350
    %v352 = vld [vmem:[%s6] sm:$0xff]
    %v353 = vld [vmem:[#allocation8 + $0x5] sm:$0x1]
    %v354 = vperm.slane %v353, 0
    %vm357 = vcmask 1041409
    %v358 = vsel %vm357, %v351, %v344
    %v359 = vsel %vm212, %v358, 0
    %361 = vmatpush.msra.mxu0 0.0
    %362 = vmatpush.msra.mxu0 0.0
    %363 = vmatpush.msra.mxu0 0.0
    %364 = vmatpush.msra.mxu0 0.0
    %365 = vmatpush.msra.mxu0 0.0
    %366 = vmatpush.msra.mxu0 0.0
    %367 = vmatpush.msra.mxu0 0.0
    %368 = vmatpush.msra.mxu0 0.0
    %369 = vmatpush.msra.mxu0 0.0
    %370 = vmatpush.msra.mxu0 0.0
    %371 = vmatpush.msra.mxu0 0.0
    %372 = vmatpush.msra.mxu0 0.0
    %373 = vmatpush.msra.mxu0 0.0
    %374 = vmatpush.msra.mxu0 0.0
    %375 = vmatpush.msra.mxu0 0.0
    %376 = vmatpush.msra.mxu0 %v352
    %377 = vmatmul.f32.gmra.mxu0 %v359
    %v378 = vpop.f32.mrf.mxu0
    %v379 = vadd.f32 %v354, %v378
    %380 = vdwg.mxu0
    %v381 = vmax.f32 %v379, 0.0
    %v382 = vld [vmem:[#allocation7] sm:$0xff]
    %v383 = vld [vmem:[#allocation7 + $0x8] sm:$0xff]
    %v384 = vld [vmem:[#allocation8 + $0x6] sm:$0x1]
    %v385 = vperm.slane %v384, 0
    %v387 = vsel %vm106, %v381, 0
    %389 = vmatpush.msra.mxu0 0.0
    %390 = vmatpush.msra.mxu0 0.0
    %391 = vmatpush.msra.mxu0 0.0
    %392 = vmatpush.msra.mxu0 0.0
    %393 = vmatpush.msra.mxu0 0.0
    %394 = vmatpush.msra.mxu0 0.0
    %395 = vmatpush.msra.mxu0 0.0
    %396 = vmatpush.msra.mxu0 0.0
    %397 = vmatpush.msra.mxu0 0.0
    %398 = vmatpush.msra.mxu0 0.0
    %399 = vmatpush.msra.mxu0 0.0
    %400 = vmatpush.msra.mxu0 0.0
    %401 = vmatpush.msra.mxu0 0.0
    %402 = vmatpush.msra.mxu0 0.0
    %403 = vmatpush.msra.mxu0 %v383
    %404 = vmatpush.msra.mxu0 %v382
    %405 = vmatmul.f32.gmra.mxu0 %v387
    %v406 = vpop.f32.mrf.mxu0
    %v407 = vadd.f32 %v385, %v406
    %408 = vdwg.mxu0
    %v409 = vmax.f32 %v407, 0.0
    %v410 = vld [vmem:[%s8] sm:$0xff]
    %v411 = vld [vmem:[%s8 + $0x8] sm:$0xff]
    %v412 = vld [vmem:[%s8 + $0x10] sm:$0xff]
    %v413 = vld [vmem:[%s8 + $0x18] sm:$0xff]
    %v414 = vld [vmem:[#allocation8 + $0x7] sm:$0x1]
    %v415 = vperm.slane %v414, 0
    %v417 = vsel %vm144, %v409, 0
    %419 = vmatpush.msra.mxu0 0.0
    %420 = vmatpush.msra.mxu0 0.0
    %421 = vmatpush.msra.mxu0 0.0
    %422 = vmatpush.msra.mxu0 0.0
    %423 = vmatpush.msra.mxu0 0.0
    %424 = vmatpush.msra.mxu0 0.0
    %425 = vmatpush.msra.mxu0 0.0
    %426 = vmatpush.msra.mxu0 0.0
    %427 = vmatpush.msra.mxu0 0.0
    %428 = vmatpush.msra.mxu0 0.0
    %429 = vmatpush.msra.mxu0 0.0
    %430 = vmatpush.msra.mxu0 0.0
    %431 = vmatpush.msra.mxu0 %v413
    %432 = vmatpush.msra.mxu0 %v412
    %433 = vmatpush.msra.mxu0 %v411
    %434 = vmatpush.msra.mxu0 %v410
    %435 = vmatmul.f32.gmra.mxu0 %v417
    %v436 = vpop.f32.mrf.mxu0
    %v437 = vadd.f32 %v415, %v436
    %438 = vdwg.mxu0
    %v439 = vxor.u32 %v437, 2147483648
    %v440 = vmul.f32 %v439, 1.442695
    %v441 = vpow.pop %v440
    %v442 = vadd.f32 %v441, 1.0
    %v443 = vrcp.pop %v442
    %v444 = vmul.f32 %v442, %v443
    %v445 = vsub.f32 1.0, %v444
    %v446 = vmul.f32 %v443, %v445
    %v447 = vadd.f32 %v443, %v446
    %vm448 = vweird.f32 %v442
    %vm449 = vweird.f32 %v443
    %vm450 = vmor %vm448, %vm449
    %v451 = vsel %vm450, %v443, %v447
    %v452 = vand.u32 2147483647, %v442
    %vm453 = vcmp.eq.f32.partialorder %v452, 8.507059e+37
    %v454 = vand.u32 %v442, 2147483648
    %v455 = vor.u32 1.1754944e-38, %v454
    %v456 = vsel %vm453, %v455, %v451
    %v457 = vmul.f32 1.0, %v456
    %v458 = vld [vmem:[%s9] sm:$0xff]
    %v459 = vld [vmem:[#allocation8 + $0x8] sm:$0x1]
    %v460 = vperm.slane %v459, 0
    %461 = vmatpush.msra.mxu0 0.0
    %462 = vmatpush.msra.mxu0 0.0
    %463 = vmatpush.msra.mxu0 0.0
    %464 = vmatpush.msra.mxu0 0.0
    %465 = vmatpush.msra.mxu0 0.0
    %466 = vmatpush.msra.mxu0 0.0
    %467 = vmatpush.msra.mxu0 0.0
    %468 = vmatpush.msra.mxu0 0.0
    %469 = vmatpush.msra.mxu0 0.0
    %470 = vmatpush.msra.mxu0 0.0
    %471 = vmatpush.msra.mxu0 0.0
    %472 = vmatpush.msra.mxu0 0.0
    %473 = vmatpush.msra.mxu0 0.0
    %474 = vmatpush.msra.mxu0 0.0
    %475 = vmatpush.msra.mxu0 0.0
    %476 = vmatpush.msra.mxu0 %v458
    %477 = vmatmul.f32.gmra.mxu0 %v359
    %v478 = vpop.f32.mrf.mxu0
    %v479 = vadd.f32 %v460, %v478
    %480 = vdwg.mxu0
    %v483 = vrot.slane %v479, 6
    %vm484 = vcmask 1041408
    %v485 = vsel %vm484, %v457, %v483
    %487 = vst [vmem:[#allocation10] sm:$0xf] %v485
    // Predicated region
    $region62: #{tpu_custom_call.1} parent=1 // pred_check
      _
    $region63: #{tpu_custom_call.1} parent=1 // pred_check_branch
      %489 = sbr.rel (0) target = $region65
    $region64: #{tpu_custom_call.1} parent=1 // pred_region
      %491 = vsyncadd [#allocation4], 0
      %s493 = sshll.u32 [#allocation10], 4
      %s494 = int_to_ptr.vmem [resolvable:$true] %s493
      %s495 = sshll.u32 %s11, 4
      %s496 = int_to_ptr.hbm [resolvable:$true] %s495
      %498 = dma.vmem_to_hbm [thread:$0]  %s494, 64, %s496, [#allocation4]
    $region65: #{tpu_custom_call.1} parent=1 // pred_fallthru
      _
    // Predicated region
    $region66: #{tpu_custom_call.1} parent=1 // pred_check
      _
    $region67: #{tpu_custom_call.1} parent=1 // pred_check_branch
      %500 = sbr.rel (0) target = $region69
    $region68: #{tpu_custom_call.1} parent=1 // pred_region
      %502 = dma.done [#allocation4], 64
    $region69: #{tpu_custom_call.1} parent=1 // pred_fallthru
      _
    %503 = vsyncpa [#allocation3], 1
    %504 = vsyncpa [#allocation6], 1
    %505 = vsyncpa [#allocation9], 1
    %506 = vsyncpa [#allocation4], 1

</llo_original>
